<compile_context>
chip_gen: v6e
topology: v6e:2x2x1
jax: 0.10.0
libtpu: 0.0.40
codegen_flags: <defaults>
</compile_context>

<pallas_src>
import functools
import math

import jax
import jax.numpy as jnp
from jax import lax
from jax.experimental import pallas as pl
from jax.experimental.pallas import tpu as pltpu


def _cdiv(a, b):
    return -(-a // b)


# -----------------------------------------------------------------------------
# pltpu.roll sign-convention probe
# -----------------------------------------------------------------------------
@functools.lru_cache(maxsize=None)
def _roll_shift_mode():
    """Resolve pltpu.roll's shift-sign convention with a tiny probe kernel.

    The loss needs circular forward shifts out[i] = a[(i + s) % n].  pltpu.roll
    puts the shift on the (otherwise idle) XLU, but its sign convention is easy
    to get wrong across versions, so probe once (eagerly, outside jit) and fall
    back to concatenate-of-slices if roll is unusable.
    """
    def probe(o_ref):
        lane = lax.broadcasted_iota(jnp.int32, (16, 128), 1)
        sub = lax.broadcasted_iota(jnp.int32, (16, 128), 0)
        o_ref[...] = pltpu.roll(lane, 3, axis=1) * 16 + pltpu.roll(sub, 5, axis=0)

    try:
        out = pl.pallas_call(
            probe, out_shape=jax.ShapeDtypeStruct((16, 128), jnp.int32))()
        v = int(jax.device_get(out)[0, 0])
    except Exception:
        return "concat"
    if v == 125 * 16 + 11:    # out[i] = in[(i - shift) % n]  (jnp.roll convention)
        return "roll_sub"
    if v == 3 * 16 + 5:       # out[i] = in[(i + shift) % n]
        return "roll_add"
    return "concat"


def _shift_fwd(a, s, axis, mode):
    """Circular forward shift: out[..., i, ...] = a[..., (i + s) % size, ...].

    Only the non-wrapped region must be correct — the caller masks every element
    whose shifted source would cross a row / plane boundary.
    """
    size = a.shape[axis]
    if mode == "roll_sub":
        return pltpu.roll(a, size - s, axis=axis)
    if mode == "roll_add":
        return pltpu.roll(a, s, axis=axis)
    # Fallback: always correct, but costs vld/vst work instead of a free XLU rotate.
    if axis == 0:
        return jnp.concatenate([a[s:, :], a[:s, :]], axis=0)
    return jnp.concatenate([a[:, s:], a[:, :s]], axis=1)


# -----------------------------------------------------------------------------
# Kernel
# -----------------------------------------------------------------------------
def _loss_kernel(x_ref, t_ref, l1_ref, ms_ref, xi_ref, yi_ref, *,
                 flattened, h, w, hw, scales, shift_mode):
    j = pl.program_id(1)

    # The output blocks are per-core partial accumulators resident in VMEM over
    # the whole "arbitrary" axis.  Initialize them — and the persistent index
    # scratch tiles (hoisted iota/mod) — once at the first step of each core.
    @pl.when(j == 0)
    def _init():
        l1_ref[...] = jnp.zeros_like(l1_ref)
        ms_ref[...] = jnp.zeros_like(ms_ref)
        shape = xi_ref.shape
        lane = lax.broadcasted_iota(jnp.int32, shape, 1)
        if flattened:
            # xi = within-row column; pad lanes (>= hw) get a sentinel that
            # never passes the "< w - s" mask.  yi = flat within-plane index.
            xi_ref[...] = jnp.where(lane < hw, lane % w, w)
            yi_ref[...] = lane
        else:
            xi_ref[...] = lane                                     # column
            yi_ref[...] = lax.broadcasted_iota(jnp.int32, shape, 0) % h  # row

    x = x_ref[...].astype(jnp.float32)
    t = t_ref[...].astype(jnp.float32)
    x_abs = jnp.abs(x)
    t_abs = jnp.abs(t)
    xi = xi_ref[...]
    yi = yi_ref[...]

    eps = jnp.float32(1e-6)

    def recip(d):
        # EUP approximate reciprocal + one Newton step: the refinement costs a
        # couple of VALU muls but keeps rel. error ~1e-7 (the exact form burns
        # several extra VALU ops per reciprocal in this VALU-bound kernel).
        r = pl.reciprocal(d, approx=True)
        return r * (2.0 - d * r)

    def grad_diff_sq(shift, axis, idx, thresh):
        sx = _shift_fwd(x, shift, axis, shift_mode)
        sxa = _shift_fwd(x_abs, shift, axis, shift_mode)   # == |shifted x| (reuse abs)
        st = _shift_fwd(t, shift, axis, shift_mode)
        sta = _shift_fwd(t_abs, shift, axis, shift_mode)
        gi = (sx - x) * recip(sxa + x_abs + eps)
        gt = (st - t) * recip(sta + t_abs + eps)
        d = jnp.where(idx < thresh, gi - gt, 0.0)           # one select per direction
        return d * d

    l1_tile = jnp.abs(x - t)
    sq_tile = jnp.zeros(x.shape, jnp.float32)

    for scale in range(scales):
        s = 2 ** scale
        acc = None
        # x-direction (shift along W).  When s >= w the reference's shifted
        # tensor equals the original, so that direction is exactly zero.
        if s < w:
            acc = grad_diff_sq(s, 1, xi, w - s)
        # y-direction (shift along H) — guarded independently of x.
        if s < h:
            if flattened:
                d2 = grad_diff_sq(s * w, 1, yi, (h - s) * w)
            else:
                d2 = grad_diff_sq(s, 0, yi, h - s)
            acc = d2 if acc is None else acc + d2
        # Both directions combined before the accumulator -> one read-modify-
        # write of sq_tile per scale (helps the single v5e store slot).
        if acc is not None:
            sq_tile = sq_tile + acc

    # One cross-lane reduction per output per grid step; each scalar partial is
    # stored broadcast over an aligned (8,128) tile -> unmasked lane-dense vst.
    l1_ref[...] = l1_ref[...] + jnp.sum(l1_tile)
    ms_ref[...] = ms_ref[...] + jnp.sum(sq_tile)


# -----------------------------------------------------------------------------
# Wrapper
# -----------------------------------------------------------------------------
@functools.lru_cache(maxsize=None)
def _vmem_capacity_bytes():
    # v7x has 64 MiB of per-core VMEM vs 128 MiB on v5e/v6e; derive block sizes
    # and the scoped limit from the real capacity so the same code never OOMs.
    try:
        return int(pltpu.get_tpu_info().vmem_capacity_bytes)
    except Exception:
        return 64 * 1024 * 1024


@functools.lru_cache(maxsize=None)
def _num_tensorcores():
    # TODO(synk): switch the leading grid axis to pltpu.CORE_PARALLEL once v7x
    # dual-TensorCore sharding of a plain "parallel" axis is verified idle-free.
    try:
        info = pltpu.get_tpu_info()
        for name in ("num_cores", "core_count", "num_tensorcores", "tensorcore_count"):
            v = getattr(info, name, None)
            if isinstance(v, int) and 1 <= v <= 8:
                return v
    except Exception:
        pass
    return 1


def dynamic_l1_multiscale_grad_loss(inp, tgt, scales):
    """Forward pass of DynamicL1MultiscaleGradLoss.

    inp, tgt: (N, C, H, W) float arrays (f32 or bf16 — bf16 halves HBM traffic;
    the kernel upcasts to f32 internally).  Returns (l1_loss, ms_grad_loss).
    """
    assert inp.shape == tgt.shape and inp.ndim == 4
    N, C, H, W = map(int, inp.shape)
    P = N * C
    itemsize = jnp.dtype(inp.dtype).itemsize
    # dtype-aware sublane alignment: 8 (f32), 16 (bf16/f16), 32 (int8/fp8).
    k0 = max(8, 32 // itemsize)

    # Generation-aware block budget / scoped VMEM limit.
    vmem = _vmem_capacity_bytes()
    if vmem >= 100 * 1024 * 1024:          # v5e / v6e: 128 MiB physical VMEM
        blk_budget = 2 * 1024 * 1024
        vmem_limit = 64 * 1024 * 1024
    else:                                  # v7x: 64 MiB per TensorCore
        blk_budget = 768 * 1024
        vmem_limit = 40 * 1024 * 1024

    flattened = W < 128
    if flattened:
        # Free contiguous reshape: plane goes fully onto the lane axis (no
        # pre-kernel fold/transpose HBM pass).  Pad the plane length up to a
        # lane multiple only if needed; pad lanes are masked via a sentinel.
        hw = H * W
        hwp = _cdiv(hw, 128) * 128
        x2 = inp.reshape(P, hw)
        t2 = tgt.reshape(P, hw)
        if hwp != hw:
            x2 = jnp.pad(x2, ((0, 0), (0, hwp - hw)))
            t2 = jnp.pad(t2, ((0, 0), (0, hwp - hw)))
        lane_dim = hwp
        plane_rows = 1
        plane_align = k0                   # one plane per sublane row
    else:
        x2 = inp.reshape(P * H, W)         # free reshape, lane axis already wide
        t2 = tgt.reshape(P * H, W)
        lane_dim = W
        plane_rows = H
        plane_align = k0 // math.gcd(H, k0)   # planes so that rows % k0 == 0

    plane_bytes = plane_rows * lane_dim * itemsize
    q_real = P

    num_cores = _num_tensorcores()
    # Only split across TensorCores when each core gets real work (avoids pure
    # zero-padding steps on 1-TC chips / tiny inputs).
    num_partials = num_cores if (num_cores > 1 and q_real >= num_cores * plane_align) else 1

    # Planes per block from the budget, aligned, clipped to the per-core share.
    bb = max(plane_align,
             (blk_budget // max(plane_bytes, 1)) // plane_align * plane_align)
    bb = min(bb, _cdiv(_cdiv(q_real, num_partials), plane_align) * plane_align)
    # TODO(synk): halo-based H-tiling for single planes larger than blk_budget
    # (bb is floored at one alignment unit, which can pressure VMEM on huge images).

    steps = _cdiv(q_real, num_partials * bb)
    q_pad = num_partials * bb * steps
    pad_planes = q_pad - P                 # zero planes contribute exactly 0
    if pad_planes:
        x2 = jnp.pad(x2, ((0, pad_planes * plane_rows), (0, 0)))
        t2 = jnp.pad(t2, ((0, pad_planes * plane_rows), (0, 0)))

    block_rows = bb * plane_rows
    block_shape = (block_rows, lane_dim)

    kernel = functools.partial(
        _loss_kernel, flattened=flattened, h=H, w=W, hw=H * W,
        scales=scales, shift_mode=_roll_shift_mode())

    l1_parts, ms_parts = pl.pallas_call(
        kernel,
        out_shape=(
            jax.ShapeDtypeStruct((num_partials, 8, 128), jnp.float32),
            jax.ShapeDtypeStruct((num_partials, 8, 128), jnp.float32),
        ),
        grid_spec=pltpu.PrefetchScalarGridSpec(
            num_scalar_prefetch=0,
            grid=(num_partials, steps),
            in_specs=[
                pl.BlockSpec(block_shape, lambda c, j: (c * steps + j, 0)),
                pl.BlockSpec(block_shape, lambda c, j: (c * steps + j, 0)),
            ],
            out_specs=[
                pl.BlockSpec((1, 8, 128), lambda c, j: (c, 0, 0)),
                pl.BlockSpec((1, 8, 128), lambda c, j: (c, 0, 0)),
            ],
            scratch_shapes=[
                pltpu.VMEM(block_shape, jnp.int32),   # xi: column coordinate
                pltpu.VMEM(block_shape, jnp.int32),   # yi: row / flat coordinate
            ],
        ),
        compiler_params=pltpu.CompilerParams(
            # Leading axis feeds multiple TensorCores where present (no-op on
            # 1-TC chips); trailing axis carries the sequential accumulation.
            dimension_semantics=("parallel", "arbitrary"),
            vmem_limit_bytes=vmem_limit,
        ),
    )(x2, t2)

    # Each partial block holds its scalar broadcast; pick one lane per core.
    return jnp.sum(l1_parts[:, 0, 0]), jnp.sum(ms_parts[:, 0, 0])


# -----------------------------------------------------------------------------
# Pure-JAX reference (mirrors the PyTorch module exactly)
# -----------------------------------------------------------------------------
def _reference(inp, tgt, scales):
    inp = inp.astype(jnp.float32)
    tgt = tgt.astype(jnp.float32)
    l1 = jnp.sum(jnp.abs(inp - tgt))
    eps = 1e-6
    in_abs = jnp.abs(inp)
    tg_abs = jnp.abs(tgt)
    ms = jnp.float32(0.0)
    for scale in range(scales):
        s = 2 ** scale
        shin_x = inp.at[:, :, :, :-s].set(inp[:, :, :, s:])
        shin_y = inp.at[:, :, :-s, :].set(inp[:, :, s:, :])
        shtg_x = tgt.at[:, :, :, :-s].set(tgt[:, :, :, s:])
        shtg_y = tgt.at[:, :, :-s, :].set(tgt[:, :, s:, :])
        gix = (shin_x - inp) / (jnp.abs(shin_x) + in_abs + eps)
        giy = (shin_y - inp) / (jnp.abs(shin_y) + in_abs + eps)
        gtx = (shtg_x - tgt) / (jnp.abs(shtg_x) + tg_abs + eps)
        gty = (shtg_y - tgt) / (jnp.abs(shtg_y) + tg_abs + eps)
        ms = ms + jnp.sum((gix - gtx) ** 2) + jnp.sum((giy - gty) ** 2)
    return l1, ms


if __name__ == "__main__":
    scales = 3
    N, C, H, W = 2, 4, 16, 16

    key = jax.random.PRNGKey(0)
    k1, k2 = jax.random.split(key)
    inp = jax.random.normal(k1, (N, C, H, W), dtype=jnp.float32)
    tgt = jax.random.normal(k2, (N, C, H, W), dtype=jnp.float32)

    l1, ms = dynamic_l1_multiscale_grad_loss(inp, tgt, scales)
    jax.block_until_ready((l1, ms))

    l1_ref, ms_ref = _reference(inp, tgt, scales)
    assert jnp.allclose(l1, l1_ref, rtol=1e-5, atol=1e-4), (l1, l1_ref)
    assert jnp.allclose(ms, ms_ref, rtol=1e-5, atol=1e-4), (ms, ms_ref)

    print("KERNEL_OK")
</pallas_src>

<mosaic_0001>
module attributes {stable_mosaic.version = 11 : i64} {
  func.func @_loss_kernel(%arg0: i32, %arg1: i32, %arg2: memref<8x256xf32, #tpu.memory_space<vmem>>, %arg3: memref<8x256xf32, #tpu.memory_space<vmem>>, %arg4: memref<1x8x128xf32, #tpu.memory_space<vmem>>, %arg5: memref<1x8x128xf32, #tpu.memory_space<vmem>>, %arg6: memref<8x256xi32, #tpu.memory_space<vmem>>, %arg7: memref<8x256xi32, #tpu.memory_space<vmem>>) attributes {dimension_semantics = [#tpu.dimension_semantics<parallel>, #tpu.dimension_semantics<arbitrary>], iteration_bounds = array<i64: 1, 1>, scalar_prefetch = 0 : i64, scratch_operands = 2 : i64, tpu.core_type = #tpu.core_type<tc>, window_params = [{transform_indices = @transform_0, window_bounds = array<i64: 8, 256>}, {transform_indices = @transform_1, window_bounds = array<i64: 8, 256>}, {transform_indices = @transform_2, window_bounds = array<i64: 1, 8, 128>}, {transform_indices = @transform_3, window_bounds = array<i64: 1, 8, 128>}]} {
    %c0_i32 = arith.constant 0 : i32
    %0 = arith.cmpi eq, %arg1, %c0_i32 : i32
    %1 = arith.extui %0 : i1 to i32
    %c0_i32_0 = arith.constant 0 : i32
    %2 = arith.cmpi ne, %1, %c0_i32_0 : i32
    scf.if %2 {
      %cst_52 = arith.constant 0.000000e+00 : f32
      %262 = vector.broadcast %cst_52 : f32 to vector<1x8x128xf32>
      %c0_53 = arith.constant 0 : index
      %c0_54 = arith.constant 0 : index
      %c0_55 = arith.constant 0 : index
      %263 = vector.load %arg4[%c0_53, %c0_54, %c0_55] : memref<1x8x128xf32, #tpu.memory_space<vmem>>, vector<1x8x128xf32>
      tpu.vector_store %arg4[%c0_53, %c0_54, %c0_55], %262 {strides = array<i32>} : memref<1x8x128xf32, #tpu.memory_space<vmem>>, vector<1x8x128xf32>,
      %cst_56 = arith.constant 0.000000e+00 : f32
      %264 = vector.broadcast %cst_56 : f32 to vector<1x8x128xf32>
      %c0_57 = arith.constant 0 : index
      %c0_58 = arith.constant 0 : index
      %c0_59 = arith.constant 0 : index
      %265 = vector.load %arg5[%c0_57, %c0_58, %c0_59] : memref<1x8x128xf32, #tpu.memory_space<vmem>>, vector<1x8x128xf32>
      tpu.vector_store %arg5[%c0_57, %c0_58, %c0_59], %264 {strides = array<i32>} : memref<1x8x128xf32, #tpu.memory_space<vmem>>, vector<1x8x128xf32>,
      %266 = tpu.iota {dimensions = array<i32: 1>} : vector<8x256xi32>
      %c256_i32 = arith.constant 256 : i32
      %267 = vector.broadcast %c256_i32 : i32 to vector<8x256xi32>
      %268 = arith.cmpi slt, %266, %267 : vector<8x256xi32>
      %c16_i32 = arith.constant 16 : i32
      %c0_i32_60 = arith.constant 0 : i32
      %269 = arith.cmpi eq, %c16_i32, %c0_i32_60 : i32
      %c1_i32 = arith.constant 1 : i32
      %270 = arith.select %269, %c1_i32, %c16_i32 : i32
      %271 = vector.broadcast %270 : i32 to vector<8x256xi32>
      %272 = arith.remsi %266, %271 : vector<8x256xi32>
      %c0_i32_61 = arith.constant 0 : i32
      %273 = vector.broadcast %c0_i32_61 : i32 to vector<8x256xi32>
      %274 = arith.cmpi ne, %272, %273 : vector<8x256xi32>
      %c0_i32_62 = arith.constant 0 : i32
      %275 = vector.broadcast %c0_i32_62 : i32 to vector<8x256xi32>
      %276 = arith.cmpi slt, %272, %275 : vector<8x256xi32>
      %c0_i32_63 = arith.constant 0 : i32
      %277 = arith.cmpi slt, %270, %c0_i32_63 : i32
      %278 = vector.broadcast %277 : i1 to vector<8x256xi1>
      %279 = vector.broadcast %278 : vector<8x256xi1> to vector<8x256xi1>
      %280 = arith.xori %276, %279 : vector<8x256xi1>
      %281 = arith.andi %280, %274 : vector<8x256xi1>
      %282 = vector.broadcast %270 : i32 to vector<8x256xi32>
      %283 = arith.addi %272, %282 : vector<8x256xi32>
      %284 = arith.select %281, %283, %272 : vector<8x256xi1>, vector<8x256xi32>
      %c16_i32_64 = arith.constant 16 : i32
      %285 = vector.broadcast %c16_i32_64 : i32 to vector<8x256xi32>
      %286 = arith.select %268, %284, %285 : vector<8x256xi1>, vector<8x256xi32>
      %c0_65 = arith.constant 0 : index
      %c0_66 = arith.constant 0 : index
      %287 = vector.load %arg6[%c0_65, %c0_66] : memref<8x256xi32, #tpu.memory_space<vmem>>, vector<8x256xi32>
      tpu.vector_store %arg6[%c0_65, %c0_66], %286 {strides = array<i32>} : memref<8x256xi32, #tpu.memory_space<vmem>>, vector<8x256xi32>,
      %c0_67 = arith.constant 0 : index
      %c0_68 = arith.constant 0 : index
      %288 = vector.load %arg7[%c0_67, %c0_68] : memref<8x256xi32, #tpu.memory_space<vmem>>, vector<8x256xi32>
      tpu.vector_store %arg7[%c0_67, %c0_68], %266 {strides = array<i32>} : memref<8x256xi32, #tpu.memory_space<vmem>>, vector<8x256xi32>,
    } else {
    }
    %c0 = arith.constant 0 : index
    %c0_1 = arith.constant 0 : index
    %3 = vector.load %arg2[%c0, %c0_1] : memref<8x256xf32, #tpu.memory_space<vmem>>, vector<8x256xf32>
    %c0_2 = arith.constant 0 : index
    %c0_3 = arith.constant 0 : index
    %4 = vector.load %arg3[%c0_2, %c0_3] : memref<8x256xf32, #tpu.memory_space<vmem>>, vector<8x256xf32>
    %5 = math.absf %3 : vector<8x256xf32>
    %6 = math.absf %4 : vector<8x256xf32>
    %c0_4 = arith.constant 0 : index
    %c0_5 = arith.constant 0 : index
    %7 = vector.load %arg6[%c0_4, %c0_5] : memref<8x256xi32, #tpu.memory_space<vmem>>, vector<8x256xi32>
    %c0_6 = arith.constant 0 : index
    %c0_7 = arith.constant 0 : index
    %8 = vector.load %arg7[%c0_6, %c0_7] : memref<8x256xi32, #tpu.memory_space<vmem>>, vector<8x256xi32>
    %9 = arith.subf %3, %4 : vector<8x256xf32>
    %10 = math.absf %9 : vector<8x256xf32>
    %cst = arith.constant 0.000000e+00 : f32
    %11 = vector.broadcast %cst : f32 to vector<8x256xf32>
    %12 = vector.extract_strided_slice %3 {offsets = [0, 1], sizes = [8, 255], strides = [1, 1]} : vector<8x256xf32> to vector<8x255xf32>
    %13 = vector.extract_strided_slice %3 {offsets = [0, 0], sizes = [8, 1], strides = [1, 1]} : vector<8x256xf32> to vector<8x1xf32>
    %14 = tpu.concatenate %12, %13 in 1 : vector<8x255xf32>, vector<8x1xf32> -> vector<8x256xf32>
    %15 = vector.extract_strided_slice %5 {offsets = [0, 1], sizes = [8, 255], strides = [1, 1]} : vector<8x256xf32> to vector<8x255xf32>
    %16 = vector.extract_strided_slice %5 {offsets = [0, 0], sizes = [8, 1], strides = [1, 1]} : vector<8x256xf32> to vector<8x1xf32>
    %17 = tpu.concatenate %15, %16 in 1 : vector<8x255xf32>, vector<8x1xf32> -> vector<8x256xf32>
    %18 = vector.extract_strided_slice %4 {offsets = [0, 1], sizes = [8, 255], strides = [1, 1]} : vector<8x256xf32> to vector<8x255xf32>
    %19 = vector.extract_strided_slice %4 {offsets = [0, 0], sizes = [8, 1], strides = [1, 1]} : vector<8x256xf32> to vector<8x1xf32>
    %20 = tpu.concatenate %18, %19 in 1 : vector<8x255xf32>, vector<8x1xf32> -> vector<8x256xf32>
    %21 = vector.extract_strided_slice %6 {offsets = [0, 1], sizes = [8, 255], strides = [1, 1]} : vector<8x256xf32> to vector<8x255xf32>
    %22 = vector.extract_strided_slice %6 {offsets = [0, 0], sizes = [8, 1], strides = [1, 1]} : vector<8x256xf32> to vector<8x1xf32>
    %23 = tpu.concatenate %21, %22 in 1 : vector<8x255xf32>, vector<8x1xf32> -> vector<8x256xf32>
    %24 = arith.subf %14, %3 : vector<8x256xf32>
    %25 = arith.addf %17, %5 : vector<8x256xf32>
    %cst_8 = arith.constant 9.99999997E-7 : f32
    %26 = vector.broadcast %cst_8 : f32 to vector<8x256xf32>
    %27 = arith.addf %25, %26 : vector<8x256xf32>
    %28 = tpu.reciprocal %27 {approx = true} : vector<8x256xf32> -> vector<8x256xf32>
    %29 = arith.mulf %27, %28 : vector<8x256xf32>
    %cst_9 = arith.constant 2.000000e+00 : f32
    %30 = vector.broadcast %cst_9 : f32 to vector<8x256xf32>
    %31 = arith.subf %30, %29 : vector<8x256xf32>
    %32 = arith.mulf %28, %31 : vector<8x256xf32>
    %33 = arith.mulf %24, %32 : vector<8x256xf32>
    %34 = arith.subf %20, %4 : vector<8x256xf32>
    %35 = arith.addf %23, %6 : vector<8x256xf32>
    %cst_10 = arith.constant 9.99999997E-7 : f32
    %36 = vector.broadcast %cst_10 : f32 to vector<8x256xf32>
    %37 = arith.addf %35, %36 : vector<8x256xf32>
    %38 = tpu.reciprocal %37 {approx = true} : vector<8x256xf32> -> vector<8x256xf32>
    %39 = arith.mulf %37, %38 : vector<8x256xf32>
    %cst_11 = arith.constant 2.000000e+00 : f32
    %40 = vector.broadcast %cst_11 : f32 to vector<8x256xf32>
    %41 = arith.subf %40, %39 : vector<8x256xf32>
    %42 = arith.mulf %38, %41 : vector<8x256xf32>
    %43 = arith.mulf %34, %42 : vector<8x256xf32>
    %c15_i32 = arith.constant 15 : i32
    %44 = vector.broadcast %c15_i32 : i32 to vector<8x256xi32>
    %45 = arith.cmpi slt, %7, %44 : vector<8x256xi32>
    %46 = arith.subf %33, %43 : vector<8x256xf32>
    %cst_12 = arith.constant 0.000000e+00 : f32
    %47 = vector.broadcast %cst_12 : f32 to vector<8x256xf32>
    %48 = arith.select %45, %46, %47 : vector<8x256xi1>, vector<8x256xf32>
    %49 = arith.mulf %48, %48 : vector<8x256xf32>
    %50 = vector.extract_strided_slice %3 {offsets = [0, 16], sizes = [8, 240], strides = [1, 1]} : vector<8x256xf32> to vector<8x240xf32>
    %51 = vector.extract_strided_slice %3 {offsets = [0, 0], sizes = [8, 16], strides = [1, 1]} : vector<8x256xf32> to vector<8x16xf32>
    %52 = tpu.concatenate %50, %51 in 1 : vector<8x240xf32>, vector<8x16xf32> -> vector<8x256xf32>
    %53 = vector.extract_strided_slice %5 {offsets = [0, 16], sizes = [8, 240], strides = [1, 1]} : vector<8x256xf32> to vector<8x240xf32>
    %54 = vector.extract_strided_slice %5 {offsets = [0, 0], sizes = [8, 16], strides = [1, 1]} : vector<8x256xf32> to vector<8x16xf32>
    %55 = tpu.concatenate %53, %54 in 1 : vector<8x240xf32>, vector<8x16xf32> -> vector<8x256xf32>
    %56 = vector.extract_strided_slice %4 {offsets = [0, 16], sizes = [8, 240], strides = [1, 1]} : vector<8x256xf32> to vector<8x240xf32>
    %57 = vector.extract_strided_slice %4 {offsets = [0, 0], sizes = [8, 16], strides = [1, 1]} : vector<8x256xf32> to vector<8x16xf32>
    %58 = tpu.concatenate %56, %57 in 1 : vector<8x240xf32>, vector<8x16xf32> -> vector<8x256xf32>
    %59 = vector.extract_strided_slice %6 {offsets = [0, 16], sizes = [8, 240], strides = [1, 1]} : vector<8x256xf32> to vector<8x240xf32>
    %60 = vector.extract_strided_slice %6 {offsets = [0, 0], sizes = [8, 16], strides = [1, 1]} : vector<8x256xf32> to vector<8x16xf32>
    %61 = tpu.concatenate %59, %60 in 1 : vector<8x240xf32>, vector<8x16xf32> -> vector<8x256xf32>
    %62 = arith.subf %52, %3 : vector<8x256xf32>
    %63 = arith.addf %55, %5 : vector<8x256xf32>
    %cst_13 = arith.constant 9.99999997E-7 : f32
    %64 = vector.broadcast %cst_13 : f32 to vector<8x256xf32>
    %65 = arith.addf %63, %64 : vector<8x256xf32>
    %66 = tpu.reciprocal %65 {approx = true} : vector<8x256xf32> -> vector<8x256xf32>
    %67 = arith.mulf %65, %66 : vector<8x256xf32>
    %cst_14 = arith.constant 2.000000e+00 : f32
    %68 = vector.broadcast %cst_14 : f32 to vector<8x256xf32>
    %69 = arith.subf %68, %67 : vector<8x256xf32>
    %70 = arith.mulf %66, %69 : vector<8x256xf32>
    %71 = arith.mulf %62, %70 : vector<8x256xf32>
    %72 = arith.subf %58, %4 : vector<8x256xf32>
    %73 = arith.addf %61, %6 : vector<8x256xf32>
    %cst_15 = arith.constant 9.99999997E-7 : f32
    %74 = vector.broadcast %cst_15 : f32 to vector<8x256xf32>
    %75 = arith.addf %73, %74 : vector<8x256xf32>
    %76 = tpu.reciprocal %75 {approx = true} : vector<8x256xf32> -> vector<8x256xf32>
    %77 = arith.mulf %75, %76 : vector<8x256xf32>
    %cst_16 = arith.constant 2.000000e+00 : f32
    %78 = vector.broadcast %cst_16 : f32 to vector<8x256xf32>
    %79 = arith.subf %78, %77 : vector<8x256xf32>
    %80 = arith.mulf %76, %79 : vector<8x256xf32>
    %81 = arith.mulf %72, %80 : vector<8x256xf32>
    %c240_i32 = arith.constant 240 : i32
    %82 = vector.broadcast %c240_i32 : i32 to vector<8x256xi32>
    %83 = arith.cmpi slt, %8, %82 : vector<8x256xi32>
    %84 = arith.subf %71, %81 : vector<8x256xf32>
    %cst_17 = arith.constant 0.000000e+00 : f32
    %85 = vector.broadcast %cst_17 : f32 to vector<8x256xf32>
    %86 = arith.select %83, %84, %85 : vector<8x256xi1>, vector<8x256xf32>
    %87 = arith.mulf %86, %86 : vector<8x256xf32>
    %88 = arith.addf %49, %87 : vector<8x256xf32>
    %89 = arith.addf %11, %88 : vector<8x256xf32>
    %90 = vector.extract_strided_slice %3 {offsets = [0, 2], sizes = [8, 254], strides = [1, 1]} : vector<8x256xf32> to vector<8x254xf32>
    %91 = vector.extract_strided_slice %3 {offsets = [0, 0], sizes = [8, 2], strides = [1, 1]} : vector<8x256xf32> to vector<8x2xf32>
    %92 = tpu.concatenate %90, %91 in 1 : vector<8x254xf32>, vector<8x2xf32> -> vector<8x256xf32>
    %93 = vector.extract_strided_slice %5 {offsets = [0, 2], sizes = [8, 254], strides = [1, 1]} : vector<8x256xf32> to vector<8x254xf32>
    %94 = vector.extract_strided_slice %5 {offsets = [0, 0], sizes = [8, 2], strides = [1, 1]} : vector<8x256xf32> to vector<8x2xf32>
    %95 = tpu.concatenate %93, %94 in 1 : vector<8x254xf32>, vector<8x2xf32> -> vector<8x256xf32>
    %96 = vector.extract_strided_slice %4 {offsets = [0, 2], sizes = [8, 254], strides = [1, 1]} : vector<8x256xf32> to vector<8x254xf32>
    %97 = vector.extract_strided_slice %4 {offsets = [0, 0], sizes = [8, 2], strides = [1, 1]} : vector<8x256xf32> to vector<8x2xf32>
    %98 = tpu.concatenate %96, %97 in 1 : vector<8x254xf32>, vector<8x2xf32> -> vector<8x256xf32>
    %99 = vector.extract_strided_slice %6 {offsets = [0, 2], sizes = [8, 254], strides = [1, 1]} : vector<8x256xf32> to vector<8x254xf32>
    %100 = vector.extract_strided_slice %6 {offsets = [0, 0], sizes = [8, 2], strides = [1, 1]} : vector<8x256xf32> to vector<8x2xf32>
    %101 = tpu.concatenate %99, %100 in 1 : vector<8x254xf32>, vector<8x2xf32> -> vector<8x256xf32>
    %102 = arith.subf %92, %3 : vector<8x256xf32>
    %103 = arith.addf %95, %5 : vector<8x256xf32>
    %cst_18 = arith.constant 9.99999997E-7 : f32
    %104 = vector.broadcast %cst_18 : f32 to vector<8x256xf32>
    %105 = arith.addf %103, %104 : vector<8x256xf32>
    %106 = tpu.reciprocal %105 {approx = true} : vector<8x256xf32> -> vector<8x256xf32>
    %107 = arith.mulf %105, %106 : vector<8x256xf32>
    %cst_19 = arith.constant 2.000000e+00 : f32
    %108 = vector.broadcast %cst_19 : f32 to vector<8x256xf32>
    %109 = arith.subf %108, %107 : vector<8x256xf32>
    %110 = arith.mulf %106, %109 : vector<8x256xf32>
    %111 = arith.mulf %102, %110 : vector<8x256xf32>
    %112 = arith.subf %98, %4 : vector<8x256xf32>
    %113 = arith.addf %101, %6 : vector<8x256xf32>
    %cst_20 = arith.constant 9.99999997E-7 : f32
    %114 = vector.broadcast %cst_20 : f32 to vector<8x256xf32>
    %115 = arith.addf %113, %114 : vector<8x256xf32>
    %116 = tpu.reciprocal %115 {approx = true} : vector<8x256xf32> -> vector<8x256xf32>
    %117 = arith.mulf %115, %116 : vector<8x256xf32>
    %cst_21 = arith.constant 2.000000e+00 : f32
    %118 = vector.broadcast %cst_21 : f32 to vector<8x256xf32>
    %119 = arith.subf %118, %117 : vector<8x256xf32>
    %120 = arith.mulf %116, %119 : vector<8x256xf32>
    %121 = arith.mulf %112, %120 : vector<8x256xf32>
    %c14_i32 = arith.constant 14 : i32
    %122 = vector.broadcast %c14_i32 : i32 to vector<8x256xi32>
    %123 = arith.cmpi slt, %7, %122 : vector<8x256xi32>
    %124 = arith.subf %111, %121 : vector<8x256xf32>
    %cst_22 = arith.constant 0.000000e+00 : f32
    %125 = vector.broadcast %cst_22 : f32 to vector<8x256xf32>
    %126 = arith.select %123, %124, %125 : vector<8x256xi1>, vector<8x256xf32>
    %127 = arith.mulf %126, %126 : vector<8x256xf32>
    %128 = vector.extract_strided_slice %3 {offsets = [0, 32], sizes = [8, 224], strides = [1, 1]} : vector<8x256xf32> to vector<8x224xf32>
    %129 = vector.extract_strided_slice %3 {offsets = [0, 0], sizes = [8, 32], strides = [1, 1]} : vector<8x256xf32> to vector<8x32xf32>
    %130 = tpu.concatenate %128, %129 in 1 : vector<8x224xf32>, vector<8x32xf32> -> vector<8x256xf32>
    %131 = vector.extract_strided_slice %5 {offsets = [0, 32], sizes = [8, 224], strides = [1, 1]} : vector<8x256xf32> to vector<8x224xf32>
    %132 = vector.extract_strided_slice %5 {offsets = [0, 0], sizes = [8, 32], strides = [1, 1]} : vector<8x256xf32> to vector<8x32xf32>
    %133 = tpu.concatenate %131, %132 in 1 : vector<8x224xf32>, vector<8x32xf32> -> vector<8x256xf32>
    %134 = vector.extract_strided_slice %4 {offsets = [0, 32], sizes = [8, 224], strides = [1, 1]} : vector<8x256xf32> to vector<8x224xf32>
    %135 = vector.extract_strided_slice %4 {offsets = [0, 0], sizes = [8, 32], strides = [1, 1]} : vector<8x256xf32> to vector<8x32xf32>
    %136 = tpu.concatenate %134, %135 in 1 : vector<8x224xf32>, vector<8x32xf32> -> vector<8x256xf32>
    %137 = vector.extract_strided_slice %6 {offsets = [0, 32], sizes = [8, 224], strides = [1, 1]} : vector<8x256xf32> to vector<8x224xf32>
    %138 = vector.extract_strided_slice %6 {offsets = [0, 0], sizes = [8, 32], strides = [1, 1]} : vector<8x256xf32> to vector<8x32xf32>
    %139 = tpu.concatenate %137, %138 in 1 : vector<8x224xf32>, vector<8x32xf32> -> vector<8x256xf32>
    %140 = arith.subf %130, %3 : vector<8x256xf32>
    %141 = arith.addf %133, %5 : vector<8x256xf32>
    %cst_23 = arith.constant 9.99999997E-7 : f32
    %142 = vector.broadcast %cst_23 : f32 to vector<8x256xf32>
    %143 = arith.addf %141, %142 : vector<8x256xf32>
    %144 = tpu.reciprocal %143 {approx = true} : vector<8x256xf32> -> vector<8x256xf32>
    %145 = arith.mulf %143, %144 : vector<8x256xf32>
    %cst_24 = arith.constant 2.000000e+00 : f32
    %146 = vector.broadcast %cst_24 : f32 to vector<8x256xf32>
    %147 = arith.subf %146, %145 : vector<8x256xf32>
    %148 = arith.mulf %144, %147 : vector<8x256xf32>
    %149 = arith.mulf %140, %148 : vector<8x256xf32>
    %150 = arith.subf %136, %4 : vector<8x256xf32>
    %151 = arith.addf %139, %6 : vector<8x256xf32>
    %cst_25 = arith.constant 9.99999997E-7 : f32
    %152 = vector.broadcast %cst_25 : f32 to vector<8x256xf32>
    %153 = arith.addf %151, %152 : vector<8x256xf32>
    %154 = tpu.reciprocal %153 {approx = true} : vector<8x256xf32> -> vector<8x256xf32>
    %155 = arith.mulf %153, %154 : vector<8x256xf32>
    %cst_26 = arith.constant 2.000000e+00 : f32
    %156 = vector.broadcast %cst_26 : f32 to vector<8x256xf32>
    %157 = arith.subf %156, %155 : vector<8x256xf32>
    %158 = arith.mulf %154, %157 : vector<8x256xf32>
    %159 = arith.mulf %150, %158 : vector<8x256xf32>
    %c224_i32 = arith.constant 224 : i32
    %160 = vector.broadcast %c224_i32 : i32 to vector<8x256xi32>
    %161 = arith.cmpi slt, %8, %160 : vector<8x256xi32>
    %162 = arith.subf %149, %159 : vector<8x256xf32>
    %cst_27 = arith.constant 0.000000e+00 : f32
    %163 = vector.broadcast %cst_27 : f32 to vector<8x256xf32>
    %164 = arith.select %161, %162, %163 : vector<8x256xi1>, vector<8x256xf32>
    %165 = arith.mulf %164, %164 : vector<8x256xf32>
    %166 = arith.addf %127, %165 : vector<8x256xf32>
    %167 = arith.addf %89, %166 : vector<8x256xf32>
    %168 = vector.extract_strided_slice %3 {offsets = [0, 4], sizes = [8, 252], strides = [1, 1]} : vector<8x256xf32> to vector<8x252xf32>
    %169 = vector.extract_strided_slice %3 {offsets = [0, 0], sizes = [8, 4], strides = [1, 1]} : vector<8x256xf32> to vector<8x4xf32>
    %170 = tpu.concatenate %168, %169 in 1 : vector<8x252xf32>, vector<8x4xf32> -> vector<8x256xf32>
    %171 = vector.extract_strided_slice %5 {offsets = [0, 4], sizes = [8, 252], strides = [1, 1]} : vector<8x256xf32> to vector<8x252xf32>
    %172 = vector.extract_strided_slice %5 {offsets = [0, 0], sizes = [8, 4], strides = [1, 1]} : vector<8x256xf32> to vector<8x4xf32>
    %173 = tpu.concatenate %171, %172 in 1 : vector<8x252xf32>, vector<8x4xf32> -> vector<8x256xf32>
    %174 = vector.extract_strided_slice %4 {offsets = [0, 4], sizes = [8, 252], strides = [1, 1]} : vector<8x256xf32> to vector<8x252xf32>
    %175 = vector.extract_strided_slice %4 {offsets = [0, 0], sizes = [8, 4], strides = [1, 1]} : vector<8x256xf32> to vector<8x4xf32>
    %176 = tpu.concatenate %174, %175 in 1 : vector<8x252xf32>, vector<8x4xf32> -> vector<8x256xf32>
    %177 = vector.extract_strided_slice %6 {offsets = [0, 4], sizes = [8, 252], strides = [1, 1]} : vector<8x256xf32> to vector<8x252xf32>
    %178 = vector.extract_strided_slice %6 {offsets = [0, 0], sizes = [8, 4], strides = [1, 1]} : vector<8x256xf32> to vector<8x4xf32>
    %179 = tpu.concatenate %177, %178 in 1 : vector<8x252xf32>, vector<8x4xf32> -> vector<8x256xf32>
    %180 = arith.subf %170, %3 : vector<8x256xf32>
    %181 = arith.addf %173, %5 : vector<8x256xf32>
    %cst_28 = arith.constant 9.99999997E-7 : f32
    %182 = vector.broadcast %cst_28 : f32 to vector<8x256xf32>
    %183 = arith.addf %181, %182 : vector<8x256xf32>
    %184 = tpu.reciprocal %183 {approx = true} : vector<8x256xf32> -> vector<8x256xf32>
    %185 = arith.mulf %183, %184 : vector<8x256xf32>
    %cst_29 = arith.constant 2.000000e+00 : f32
    %186 = vector.broadcast %cst_29 : f32 to vector<8x256xf32>
    %187 = arith.subf %186, %185 : vector<8x256xf32>
    %188 = arith.mulf %184, %187 : vector<8x256xf32>
    %189 = arith.mulf %180, %188 : vector<8x256xf32>
    %190 = arith.subf %176, %4 : vector<8x256xf32>
    %191 = arith.addf %179, %6 : vector<8x256xf32>
    %cst_30 = arith.constant 9.99999997E-7 : f32
    %192 = vector.broadcast %cst_30 : f32 to vector<8x256xf32>
    %193 = arith.addf %191, %192 : vector<8x256xf32>
    %194 = tpu.reciprocal %193 {approx = true} : vector<8x256xf32> -> vector<8x256xf32>
    %195 = arith.mulf %193, %194 : vector<8x256xf32>
    %cst_31 = arith.constant 2.000000e+00 : f32
    %196 = vector.broadcast %cst_31 : f32 to vector<8x256xf32>
    %197 = arith.subf %196, %195 : vector<8x256xf32>
    %198 = arith.mulf %194, %197 : vector<8x256xf32>
    %199 = arith.mulf %190, %198 : vector<8x256xf32>
    %c12_i32 = arith.constant 12 : i32
    %200 = vector.broadcast %c12_i32 : i32 to vector<8x256xi32>
    %201 = arith.cmpi slt, %7, %200 : vector<8x256xi32>
    %202 = arith.subf %189, %199 : vector<8x256xf32>
    %cst_32 = arith.constant 0.000000e+00 : f32
    %203 = vector.broadcast %cst_32 : f32 to vector<8x256xf32>
    %204 = arith.select %201, %202, %203 : vector<8x256xi1>, vector<8x256xf32>
    %205 = arith.mulf %204, %204 : vector<8x256xf32>
    %206 = vector.extract_strided_slice %3 {offsets = [0, 64], sizes = [8, 192], strides = [1, 1]} : vector<8x256xf32> to vector<8x192xf32>
    %207 = vector.extract_strided_slice %3 {offsets = [0, 0], sizes = [8, 64], strides = [1, 1]} : vector<8x256xf32> to vector<8x64xf32>
    %208 = tpu.concatenate %206, %207 in 1 : vector<8x192xf32>, vector<8x64xf32> -> vector<8x256xf32>
    %209 = vector.extract_strided_slice %5 {offsets = [0, 64], sizes = [8, 192], strides = [1, 1]} : vector<8x256xf32> to vector<8x192xf32>
    %210 = vector.extract_strided_slice %5 {offsets = [0, 0], sizes = [8, 64], strides = [1, 1]} : vector<8x256xf32> to vector<8x64xf32>
    %211 = tpu.concatenate %209, %210 in 1 : vector<8x192xf32>, vector<8x64xf32> -> vector<8x256xf32>
    %212 = vector.extract_strided_slice %4 {offsets = [0, 64], sizes = [8, 192], strides = [1, 1]} : vector<8x256xf32> to vector<8x192xf32>
    %213 = vector.extract_strided_slice %4 {offsets = [0, 0], sizes = [8, 64], strides = [1, 1]} : vector<8x256xf32> to vector<8x64xf32>
    %214 = tpu.concatenate %212, %213 in 1 : vector<8x192xf32>, vector<8x64xf32> -> vector<8x256xf32>
    %215 = vector.extract_strided_slice %6 {offsets = [0, 64], sizes = [8, 192], strides = [1, 1]} : vector<8x256xf32> to vector<8x192xf32>
    %216 = vector.extract_strided_slice %6 {offsets = [0, 0], sizes = [8, 64], strides = [1, 1]} : vector<8x256xf32> to vector<8x64xf32>
    %217 = tpu.concatenate %215, %216 in 1 : vector<8x192xf32>, vector<8x64xf32> -> vector<8x256xf32>
    %218 = arith.subf %208, %3 : vector<8x256xf32>
    %219 = arith.addf %211, %5 : vector<8x256xf32>
    %cst_33 = arith.constant 9.99999997E-7 : f32
    %220 = vector.broadcast %cst_33 : f32 to vector<8x256xf32>
    %221 = arith.addf %219, %220 : vector<8x256xf32>
    %222 = tpu.reciprocal %221 {approx = true} : vector<8x256xf32> -> vector<8x256xf32>
    %223 = arith.mulf %221, %222 : vector<8x256xf32>
    %cst_34 = arith.constant 2.000000e+00 : f32
    %224 = vector.broadcast %cst_34 : f32 to vector<8x256xf32>
    %225 = arith.subf %224, %223 : vector<8x256xf32>
    %226 = arith.mulf %222, %225 : vector<8x256xf32>
    %227 = arith.mulf %218, %226 : vector<8x256xf32>
    %228 = arith.subf %214, %4 : vector<8x256xf32>
    %229 = arith.addf %217, %6 : vector<8x256xf32>
    %cst_35 = arith.constant 9.99999997E-7 : f32
    %230 = vector.broadcast %cst_35 : f32 to vector<8x256xf32>
    %231 = arith.addf %229, %230 : vector<8x256xf32>
    %232 = tpu.reciprocal %231 {approx = true} : vector<8x256xf32> -> vector<8x256xf32>
    %233 = arith.mulf %231, %232 : vector<8x256xf32>
    %cst_36 = arith.constant 2.000000e+00 : f32
    %234 = vector.broadcast %cst_36 : f32 to vector<8x256xf32>
    %235 = arith.subf %234, %233 : vector<8x256xf32>
    %236 = arith.mulf %232, %235 : vector<8x256xf32>
    %237 = arith.mulf %228, %236 : vector<8x256xf32>
    %c192_i32 = arith.constant 192 : i32
    %238 = vector.broadcast %c192_i32 : i32 to vector<8x256xi32>
    %239 = arith.cmpi slt, %8, %238 : vector<8x256xi32>
    %240 = arith.subf %227, %237 : vector<8x256xf32>
    %cst_37 = arith.constant 0.000000e+00 : f32
    %241 = vector.broadcast %cst_37 : f32 to vector<8x256xf32>
    %242 = arith.select %239, %240, %241 : vector<8x256xi1>, vector<8x256xf32>
    %243 = arith.mulf %242, %242 : vector<8x256xf32>
    %244 = arith.addf %205, %243 : vector<8x256xf32>
    %245 = arith.addf %167, %244 : vector<8x256xf32>
    %c0_38 = arith.constant 0 : index
    %c0_39 = arith.constant 0 : index
    %c0_40 = arith.constant 0 : index
    %246 = vector.load %arg4[%c0_38, %c0_39, %c0_40] : memref<1x8x128xf32, #tpu.memory_space<vmem>>, vector<1x8x128xf32>
    %247 = vector.shape_cast %10 : vector<8x256xf32> to vector<1x8x256xf32>
    %cst_41 = arith.constant dense<0.000000e+00> : vector<1xf32>
    %248 = vector.multi_reduction <add>, %247, %cst_41 [1, 2] : vector<1x8x256xf32> to vector<1xf32>
    %249 = vector.shape_cast %248 : vector<1xf32> to vector<1x1x1xf32>
    %250 = vector.extract %249[0, 0, 0] : f32 from vector<1x1x1xf32>
    %251 = vector.broadcast %250 : f32 to vector<1x8x128xf32>
    %252 = arith.addf %246, %251 : vector<1x8x128xf32>
    %c0_42 = arith.constant 0 : index
    %c0_43 = arith.constant 0 : index
    %c0_44 = arith.constant 0 : index
    %253 = vector.load %arg4[%c0_42, %c0_43, %c0_44] : memref<1x8x128xf32, #tpu.memory_space<vmem>>, vector<1x8x128xf32>
    tpu.vector_store %arg4[%c0_42, %c0_43, %c0_44], %252 {strides = array<i32>} : memref<1x8x128xf32, #tpu.memory_space<vmem>>, vector<1x8x128xf32>,
    %c0_45 = arith.constant 0 : index
    %c0_46 = arith.constant 0 : index
    %c0_47 = arith.constant 0 : index
    %254 = vector.load %arg5[%c0_45, %c0_46, %c0_47] : memref<1x8x128xf32, #tpu.memory_space<vmem>>, vector<1x8x128xf32>
    %255 = vector.shape_cast %245 : vector<8x256xf32> to vector<1x8x256xf32>
    %cst_48 = arith.constant dense<0.000000e+00> : vector<1xf32>
    %256 = vector.multi_reduction <add>, %255, %cst_48 [1, 2] : vector<1x8x256xf32> to vector<1xf32>
    %257 = vector.shape_cast %256 : vector<1xf32> to vector<1x1x1xf32>
    %258 = vector.extract %257[0, 0, 0] : f32 from vector<1x1x1xf32>
    %259 = vector.broadcast %258 : f32 to vector<1x8x128xf32>
    %260 = arith.addf %254, %259 : vector<1x8x128xf32>
    %c0_49 = arith.constant 0 : index
    %c0_50 = arith.constant 0 : index
    %c0_51 = arith.constant 0 : index
    %261 = vector.load %arg5[%c0_49, %c0_50, %c0_51] : memref<1x8x128xf32, #tpu.memory_space<vmem>>, vector<1x8x128xf32>
    tpu.vector_store %arg5[%c0_49, %c0_50, %c0_51], %260 {strides = array<i32>} : memref<1x8x128xf32, #tpu.memory_space<vmem>>, vector<1x8x128xf32>,
    return
  }
  func.func @transform_0(%arg0: i32, %arg1: i32) -> (i32, i32) {
    %c1_i32 = arith.constant 1 : i32
    %0 = arith.muli %arg0, %c1_i32 : i32
    %1 = arith.addi %0, %arg1 : i32
    %c0_i32 = arith.constant 0 : i32
    %c0_i32_0 = arith.constant 0 : i32
    return %1, %c0_i32 : i32, i32
  }
  func.func @transform_1(%arg0: i32, %arg1: i32) -> (i32, i32) {
    %c1_i32 = arith.constant 1 : i32
    %0 = arith.muli %arg0, %c1_i32 : i32
    %1 = arith.addi %0, %arg1 : i32
    %c0_i32 = arith.constant 0 : i32
    %c0_i32_0 = arith.constant 0 : i32
    return %1, %c0_i32 : i32, i32
  }
  func.func @transform_2(%arg0: i32, %arg1: i32) -> (i32, i32, i32) {
    %c0_i32 = arith.constant 0 : i32
    %c0_i32_0 = arith.constant 0 : i32
    %c0_i32_1 = arith.constant 0 : i32
    return %arg0, %c0_i32, %c0_i32_0 : i32, i32, i32
  }
  func.func @transform_3(%arg0: i32, %arg1: i32) -> (i32, i32, i32) {
    %c0_i32 = arith.constant 0 : i32
    %c0_i32_0 = arith.constant 0 : i32
    %c0_i32_1 = arith.constant 0 : i32
    return %arg0, %c0_i32, %c0_i32_0 : i32, i32, i32
  }
}

</mosaic_0001>

<llo_original>
// kernel: tpu_custom_call.1
$region0: #{tpu_custom_call.1}
  #allocation0 [shape = 'u32[]', space=smem, size = 0x4, offset = 0x4, fixed_abs, tag = 'smem constant byte address 0x4 - core index']
  #allocation1 [shape = 'u32[144,128]{1,0:T(1,128)}', space=vmem, size = 0x12000, scoped, tag = 'internal scratch']
  #allocation2 [shape = 's32[8,256]{1,0:T(8,128)}', space=vmem, size = 0x2000, scoped, tag = 'scratch operand']
  #allocation3 [shape = 's32[8,256]{1,0:T(8,128)}', space=vmem, size = 0x2000, scoped, tag = 'scratch operand']
  %s0 = inlined_call_operand.hbm [shape: f32[8,256], index: 0, kind: input, shape index: {}]
  %s1 = inlined_call_operand.hbm [shape: f32[8,256], index: 1, kind: input, shape index: {}]
  %s2 = inlined_call_operand.hbm [shape: f32[1,8,128], index: 2, kind: output, shape index: {0}]
  %s3 = inlined_call_operand.hbm [shape: f32[1,8,128], index: 3, kind: output, shape index: {1}]
  %4 = xla_tuple %s2, %s3
  %s5 = sld [smem:[#allocation0]]
  $region38: #{tpu_custom_call.1} parent=0
    _
  %s7 = ssub.s32 1, %s5
  %s8 = scalar_select 0, %s7, %s5
  $region1: #{tpu_custom_call.1} parent=0
    #allocation4 [shape = 'u8[8192]{0}', space=vmem, size = 0x2000, scoped, tag = 'input window, operand 0, single buffered']
    #allocation5 [shape = 's32[1]{0}', space=sflag, size = 0x4, scoped, tag = 'scoped memory for tpu_custom_call.1']
    #allocation6 [shape = 's32[1]{0}', space=sflag, size = 0x4, scoped, tag = 'scoped memory for tpu_custom_call.1']
    #allocation7 [shape = 'u8[8192]{0}', space=vmem, size = 0x2000, scoped, tag = 'input window, operand 1, single buffered']
    #allocation8 [shape = 's32[1]{0}', space=sflag, size = 0x4, scoped, tag = 'scoped memory for tpu_custom_call.1']
    #allocation9 [shape = 'u8[4096]{0}', space=vmem, size = 0x1000, scoped, tag = 'output window, operand 0, single buffered']
    #allocation10 [shape = 'u8[4096]{0}', space=vmem, size = 0x1000, scoped, tag = 'output window, operand 1, single buffered']
    #allocation11 [shape = 's32[1]{0}', space=sflag, size = 0x4, scoped, tag = 'scoped memory for tpu_custom_call.1']
    %9 = vsyncpa [#allocation5], 0
    %10 = vsyncpa [#allocation8], 0
    %11 = vsyncpa [#allocation6], 0
    %12 = vsyncpa [#allocation11], 0
    // Predicated region
    $region2: #{tpu_custom_call.1} parent=1 // pred_check
      _
    $region3: #{tpu_custom_call.1} parent=1 // pred_check_branch
      %14 = sbr.rel (0) target = $region5
    $region4: #{tpu_custom_call.1} parent=1 // pred_region
      %s15 = sadd.s32 0, 0
      %s17 = ssub.s32 256, 256
      %18 = vsyncadd [#allocation5], %s17
      %s19 = smul.addr %s15, 2
      %s20 = smul.addr %s19, 128
      %s21 = scalar_lea.hbm %s0, %s20
      %s23 = sshll.u32 [#allocation4], 4
      %s24 = int_to_ptr.vmem [resolvable:$true] %s23
      %26 = dma.hbm_to_vmem [thread:$0]  %s21, 256, %s24, [#allocation5]
    $region5: #{tpu_custom_call.1} parent=1 // pred_fallthru
      _
    // Predicated region
    $region6: #{tpu_custom_call.1} parent=1 // pred_check
      _
    $region7: #{tpu_custom_call.1} parent=1 // pred_check_branch
      %28 = sbr.rel (0) target = $region9
    $region8: #{tpu_custom_call.1} parent=1 // pred_region
      %s29 = sadd.s32 0, 0
      %s31 = ssub.s32 256, 256
      %32 = vsyncadd [#allocation8], %s31
      %s33 = smul.addr %s29, 2
      %s34 = smul.addr %s33, 128
      %s35 = scalar_lea.hbm %s1, %s34
      %s37 = sshll.u32 [#allocation7], 4
      %s38 = int_to_ptr.vmem [resolvable:$true] %s37
      %40 = dma.hbm_to_vmem [thread:$0]  %s35, 256, %s38, [#allocation8]
    $region9: #{tpu_custom_call.1} parent=1 // pred_fallthru
      _
    // Predicated region
    $region10: #{tpu_custom_call.1} parent=1 // pred_check
      _
    $region11: #{tpu_custom_call.1} parent=1 // pred_check_branch
      %42 = sbr.rel (0) target = $region13
    $region12: #{tpu_custom_call.1} parent=1 // pred_region
      %43 = dma.done [#allocation5], 256
    $region13: #{tpu_custom_call.1} parent=1 // pred_fallthru
      _
    // Predicated region
    $region14: #{tpu_custom_call.1} parent=1 // pred_check
      _
    $region15: #{tpu_custom_call.1} parent=1 // pred_check_branch
      %45 = sbr.rel (0) target = $region17
    $region16: #{tpu_custom_call.1} parent=1 // pred_region
      %46 = dma.done [#allocation8], 256
    $region17: #{tpu_custom_call.1} parent=1 // pred_fallthru
      _
    %s47 = sadd.s32 0, 0
    %s48 = sadd.s32 0, 0
    %p49 = scmp.eq.s32.totalorder 0, 0
    // Predicated region
    $region18: #{tpu_custom_call.1} parent=1 // pred_check
      %p50 = pneg %p49
    $region19: #{tpu_custom_call.1} parent=1 // pred_check_branch
      %52 = sbr.rel (%p50) target = $region21
    $region20: #{tpu_custom_call.1} parent=1 // pred_region
      %53 = vst [vmem:[#allocation9] sm:$0xff] 0.0
      %54 = vst [vmem:[#allocation10] sm:$0xff] 0.0
      %v55 = vlaneseq
      %v56 = vand.u32 %v55, 127
      %v57 = vadd.s32 %v56, 128
      %vm58 = vcmp.lt.s32.totalorder %v56, 256
      %vm59 = vcmp.lt.s32.totalorder %v57, 256
      %vm60 = vcmp.lt.s32.totalorder %v56, 0
      %v61 = vsub.s32 0, %v56
      %v62 = vsel %vm60, %v61, %v56
      %v63 = vshrl.u32 %v62, 4
      %v64 = vand.u32 %v62, 15
      %v65 = vsub.s32 0, %v64
      %v66 = vsel %vm60, %v65, %v64
      %vm67 = vcmp.lt.s32.totalorder %v57, 0
      %v68 = vsub.s32 0, %v57
      %v69 = vsel %vm67, %v68, %v57
      %v70 = vshrl.u32 %v69, 4
      %v71 = vand.u32 %v69, 15
      %v72 = vsub.s32 0, %v71
      %v73 = vsel %vm67, %v72, %v71
      %vm74 = vcmp.ne.s32.totalorder %v66, 0
      %vm75 = vcmp.ne.s32.totalorder %v73, 0
      %vm76 = vcmp.lt.s32.totalorder %v66, 0
      %vm77 = vcmp.lt.s32.totalorder %v73, 0
      %vm78 = vmand %vm76, %vm74
      %vm79 = vmand %vm77, %vm75
      %v80 = vadd.s32 %v66, 16
      %v81 = vadd.s32 %v73, 16
      %v82 = vsel %vm78, %v80, %v66
      %v83 = vsel %vm79, %v81, %v73
      %v84 = vsel %vm58, %v82, 16
      %v85 = vsel %vm59, %v83, 16
      %86 = vst [vmem:[#allocation2] sm:$0xff] %v84
      %87 = vst [vmem:[#allocation2 + $0x8] sm:$0xff] %v85
      %88 = vst [vmem:[#allocation3] sm:$0xff] %v56
      %89 = vst [vmem:[#allocation3 + $0x8] sm:$0xff] %v57
    $region21: #{tpu_custom_call.1} parent=1 // pred_fallthru
      _
    %v90 = vld [vmem:[#allocation4] sm:$0xff]
    %v91 = vld [vmem:[#allocation4 + $0x8] sm:$0xff]
    %v92 = vld [vmem:[#allocation7] sm:$0xff]
    %v93 = vld [vmem:[#allocation7 + $0x8] sm:$0xff]
    %v94 = vand.u32 2147483647, %v90
    %v95 = vand.u32 2147483647, %v91
    %v96 = vand.u32 2147483647, %v92
    %v97 = vand.u32 2147483647, %v93
    %v98 = vld [vmem:[#allocation2] sm:$0xff]
    %v99 = vld [vmem:[#allocation2 + $0x8] sm:$0xff]
    %v100 = vld [vmem:[#allocation3] sm:$0xff]
    %v101 = vld [vmem:[#allocation3 + $0x8] sm:$0xff]
    %v102 = vsub.f32 %v90, %v92
    %v103 = vsub.f32 %v91, %v93
    %v104 = vand.u32 2147483647, %v102
    %v105 = vand.u32 2147483647, %v103
    %108 = vrot.lane.b32.xlu0 %v90, 127
    %v109 = vpop.permute.xlu0 %108
    %110 = vrot.lane.b32.xlu0 %v91, 127
    %v111 = vpop.permute.xlu0 %110
    %vm112 = vcmask 1039360
    %v113 = vsel %vm112, %v109, %v111
    %v117 = vsel %vm112, %v111, %v109
    %120 = vrot.lane.b32.xlu0 %v94, 127
    %v121 = vpop.permute.xlu0 %120
    %122 = vrot.lane.b32.xlu0 %v95, 127
    %v123 = vpop.permute.xlu0 %122
    %v124 = vsel %vm112, %v121, %v123
    %v128 = vsel %vm112, %v123, %v121
    %131 = vrot.lane.b32.xlu0 %v92, 127
    %v132 = vpop.permute.xlu0 %131
    %133 = vrot.lane.b32.xlu0 %v93, 127
    %v134 = vpop.permute.xlu0 %133
    %v135 = vsel %vm112, %v132, %v134
    %v139 = vsel %vm112, %v134, %v132
    %142 = vrot.lane.b32.xlu0 %v96, 127
    %v143 = vpop.permute.xlu0 %142
    %144 = vrot.lane.b32.xlu0 %v97, 127
    %v145 = vpop.permute.xlu0 %144
    %v146 = vsel %vm112, %v143, %v145
    %v150 = vsel %vm112, %v145, %v143
    %v151 = vsub.f32 %v113, %v90
    %v152 = vsub.f32 %v117, %v91
    %v153 = vadd.f32 %v124, %v94
    %v154 = vadd.f32 %v128, %v95
    %v155 = vadd.f32 %v153, 1e-06
    %v156 = vadd.f32 %v154, 1e-06
    %v157 = vrcp.pop %v155
    %v158 = vrcp.pop %v156
    %v159 = vmul.f32 %v155, %v157
    %v160 = vmul.f32 %v156, %v158
    %v161 = vsub.f32 2.0, %v159
    %v162 = vsub.f32 2.0, %v160
    %v163 = vmul.f32 %v157, %v161
    %v164 = vmul.f32 %v158, %v162
    %v165 = vmul.f32 %v151, %v163
    %v166 = vmul.f32 %v152, %v164
    %v167 = vsub.f32 %v135, %v92
    %v168 = vsub.f32 %v139, %v93
    %v169 = vadd.f32 %v146, %v96
    %v170 = vadd.f32 %v150, %v97
    %v171 = vadd.f32 %v169, 1e-06
    %v172 = vadd.f32 %v170, 1e-06
    %v173 = vrcp.pop %v171
    %v174 = vrcp.pop %v172
    %v175 = vmul.f32 %v171, %v173
    %v176 = vmul.f32 %v172, %v174
    %v177 = vsub.f32 2.0, %v175
    %v178 = vsub.f32 2.0, %v176
    %v179 = vmul.f32 %v173, %v177
    %v180 = vmul.f32 %v174, %v178
    %v181 = vmul.f32 %v167, %v179
    %v182 = vmul.f32 %v168, %v180
    %vm183 = vcmp.lt.s32.totalorder %v98, 15
    %vm184 = vcmp.lt.s32.totalorder %v99, 15
    %v185 = vsub.f32 %v165, %v181
    %v186 = vsub.f32 %v166, %v182
    %v187 = vsel %vm183, %v185, 0.0
    %v188 = vsel %vm184, %v186, 0.0
    %v189 = vmul.f32 %v187, %v187
    %v190 = vmul.f32 %v188, %v188
    %191 = vrot.lane.b32.xlu0 %v90, 112
    %v192 = vpop.permute.xlu0 %191
    %193 = vrot.lane.b32.xlu0 %v91, 112
    %v194 = vpop.permute.xlu0 %193
    %vm195 = vcmask 916480
    %v196 = vsel %vm195, %v192, %v194
    %v200 = vsel %vm195, %v194, %v192
    %201 = vrot.lane.b32.xlu0 %v94, 112
    %v202 = vpop.permute.xlu0 %201
    %203 = vrot.lane.b32.xlu0 %v95, 112
    %v204 = vpop.permute.xlu0 %203
    %v205 = vsel %vm195, %v202, %v204
    %v209 = vsel %vm195, %v204, %v202
    %210 = vrot.lane.b32.xlu0 %v92, 112
    %v211 = vpop.permute.xlu0 %210
    %212 = vrot.lane.b32.xlu0 %v93, 112
    %v213 = vpop.permute.xlu0 %212
    %v214 = vsel %vm195, %v211, %v213
    %v218 = vsel %vm195, %v213, %v211
    %219 = vrot.lane.b32.xlu0 %v96, 112
    %v220 = vpop.permute.xlu0 %219
    %221 = vrot.lane.b32.xlu0 %v97, 112
    %v222 = vpop.permute.xlu0 %221
    %v223 = vsel %vm195, %v220, %v222
    %v227 = vsel %vm195, %v222, %v220
    %v228 = vsub.f32 %v196, %v90
    %v229 = vsub.f32 %v200, %v91
    %v230 = vadd.f32 %v205, %v94
    %v231 = vadd.f32 %v209, %v95
    %v232 = vadd.f32 %v230, 1e-06
    %v233 = vadd.f32 %v231, 1e-06
    %v234 = vrcp.pop %v232
    %v235 = vrcp.pop %v233
    %v236 = vmul.f32 %v232, %v234
    %v237 = vmul.f32 %v233, %v235
    %v238 = vsub.f32 2.0, %v236
    %v239 = vsub.f32 2.0, %v237
    %v240 = vmul.f32 %v234, %v238
    %v241 = vmul.f32 %v235, %v239
    %v242 = vmul.f32 %v228, %v240
    %v243 = vmul.f32 %v229, %v241
    %v244 = vsub.f32 %v214, %v92
    %v245 = vsub.f32 %v218, %v93
    %v246 = vadd.f32 %v223, %v96
    %v247 = vadd.f32 %v227, %v97
    %v248 = vadd.f32 %v246, 1e-06
    %v249 = vadd.f32 %v247, 1e-06
    %v250 = vrcp.pop %v248
    %v251 = vrcp.pop %v249
    %v252 = vmul.f32 %v248, %v250
    %v253 = vmul.f32 %v249, %v251
    %v254 = vsub.f32 2.0, %v252
    %v255 = vsub.f32 2.0, %v253
    %v256 = vmul.f32 %v250, %v254
    %v257 = vmul.f32 %v251, %v255
    %v258 = vmul.f32 %v244, %v256
    %v259 = vmul.f32 %v245, %v257
    %vm260 = vcmp.lt.s32.totalorder %v100, 240
    %vm261 = vcmp.lt.s32.totalorder %v101, 240
    %v262 = vsub.f32 %v242, %v258
    %v263 = vsub.f32 %v243, %v259
    %v264 = vsel %vm260, %v262, 0.0
    %v265 = vsel %vm261, %v263, 0.0
    %v266 = vmul.f32 %v264, %v264
    %v267 = vmul.f32 %v265, %v265
    %v268 = vadd.f32 %v189, %v266
    %v269 = vadd.f32 %v190, %v267
    %v270 = vadd.f32 %v268, 0.0
    %v271 = vadd.f32 %v269, 0.0
    %272 = vrot.lane.b32.xlu0 %v90, 126
    %v273 = vpop.permute.xlu0 %272
    %274 = vrot.lane.b32.xlu0 %v91, 126
    %v275 = vpop.permute.xlu0 %274
    %vm276 = vcmask 1031168
    %v277 = vsel %vm276, %v273, %v275
    %v281 = vsel %vm276, %v275, %v273
    %282 = vrot.lane.b32.xlu0 %v94, 126
    %v283 = vpop.permute.xlu0 %282
    %284 = vrot.lane.b32.xlu0 %v95, 126
    %v285 = vpop.permute.xlu0 %284
    %v286 = vsel %vm276, %v283, %v285
    %v290 = vsel %vm276, %v285, %v283
    %291 = vrot.lane.b32.xlu0 %v92, 126
    %v292 = vpop.permute.xlu0 %291
    %293 = vrot.lane.b32.xlu0 %v93, 126
    %v294 = vpop.permute.xlu0 %293
    %v295 = vsel %vm276, %v292, %v294
    %v299 = vsel %vm276, %v294, %v292
    %300 = vrot.lane.b32.xlu0 %v96, 126
    %v301 = vpop.permute.xlu0 %300
    %302 = vrot.lane.b32.xlu0 %v97, 126
    %v303 = vpop.permute.xlu0 %302
    %v304 = vsel %vm276, %v301, %v303
    %v308 = vsel %vm276, %v303, %v301
    %v309 = vsub.f32 %v277, %v90
    %v310 = vsub.f32 %v281, %v91
    %v311 = vadd.f32 %v286, %v94
    %v312 = vadd.f32 %v290, %v95
    %v313 = vadd.f32 %v311, 1e-06
    %v314 = vadd.f32 %v312, 1e-06
    %v315 = vrcp.pop %v313
    %v316 = vrcp.pop %v314
    %v317 = vmul.f32 %v313, %v315
    %v318 = vmul.f32 %v314, %v316
    %v319 = vsub.f32 2.0, %v317
    %v320 = vsub.f32 2.0, %v318
    %v321 = vmul.f32 %v315, %v319
    %v322 = vmul.f32 %v316, %v320
    %v323 = vmul.f32 %v309, %v321
    %v324 = vmul.f32 %v310, %v322
    %v325 = vsub.f32 %v295, %v92
    %v326 = vsub.f32 %v299, %v93
    %v327 = vadd.f32 %v304, %v96
    %v328 = vadd.f32 %v308, %v97
    %v329 = vadd.f32 %v327, 1e-06
    %v330 = vadd.f32 %v328, 1e-06
    %v331 = vrcp.pop %v329
    %v332 = vrcp.pop %v330
    %v333 = vmul.f32 %v329, %v331
    %v334 = vmul.f32 %v330, %v332
    %v335 = vsub.f32 2.0, %v333
    %v336 = vsub.f32 2.0, %v334
    %v337 = vmul.f32 %v331, %v335
    %v338 = vmul.f32 %v332, %v336
    %v339 = vmul.f32 %v325, %v337
    %v340 = vmul.f32 %v326, %v338
    %vm341 = vcmp.lt.s32.totalorder %v98, 14
    %vm342 = vcmp.lt.s32.totalorder %v99, 14
    %v343 = vsub.f32 %v323, %v339
    %v344 = vsub.f32 %v324, %v340
    %v345 = vsel %vm341, %v343, 0.0
    %v346 = vsel %vm342, %v344, 0.0
    %v347 = vmul.f32 %v345, %v345
    %v348 = vmul.f32 %v346, %v346
    %349 = vrot.lane.b32.xlu0 %v90, 96
    %v350 = vpop.permute.xlu0 %349
    %351 = vrot.lane.b32.xlu0 %v91, 96
    %v352 = vpop.permute.xlu0 %351
    %vm353 = vcmask 785408
    %v354 = vsel %vm353, %v350, %v352
    %v358 = vsel %vm353, %v352, %v350
    %359 = vrot.lane.b32.xlu0 %v94, 96
    %v360 = vpop.permute.xlu0 %359
    %361 = vrot.lane.b32.xlu0 %v95, 96
    %v362 = vpop.permute.xlu0 %361
    %v363 = vsel %vm353, %v360, %v362
    %v367 = vsel %vm353, %v362, %v360
    %368 = vrot.lane.b32.xlu0 %v92, 96
    %v369 = vpop.permute.xlu0 %368
    %370 = vrot.lane.b32.xlu0 %v93, 96
    %v371 = vpop.permute.xlu0 %370
    %v372 = vsel %vm353, %v369, %v371
    %v376 = vsel %vm353, %v371, %v369
    %377 = vrot.lane.b32.xlu0 %v96, 96
    %v378 = vpop.permute.xlu0 %377
    %379 = vrot.lane.b32.xlu0 %v97, 96
    %v380 = vpop.permute.xlu0 %379
    %v381 = vsel %vm353, %v378, %v380
    %v385 = vsel %vm353, %v380, %v378
    %v386 = vsub.f32 %v354, %v90
    %v387 = vsub.f32 %v358, %v91
    %v388 = vadd.f32 %v363, %v94
    %v389 = vadd.f32 %v367, %v95
    %v390 = vadd.f32 %v388, 1e-06
    %v391 = vadd.f32 %v389, 1e-06
    %v392 = vrcp.pop %v390
    %v393 = vrcp.pop %v391
    %v394 = vmul.f32 %v390, %v392
    %v395 = vmul.f32 %v391, %v393
    %v396 = vsub.f32 2.0, %v394
    %v397 = vsub.f32 2.0, %v395
    %v398 = vmul.f32 %v392, %v396
    %v399 = vmul.f32 %v393, %v397
    %v400 = vmul.f32 %v386, %v398
    %v401 = vmul.f32 %v387, %v399
    %v402 = vsub.f32 %v372, %v92
    %v403 = vsub.f32 %v376, %v93
    %v404 = vadd.f32 %v381, %v96
    %v405 = vadd.f32 %v385, %v97
    %v406 = vadd.f32 %v404, 1e-06
    %v407 = vadd.f32 %v405, 1e-06
    %v408 = vrcp.pop %v406
    %v409 = vrcp.pop %v407
    %v410 = vmul.f32 %v406, %v408
    %v411 = vmul.f32 %v407, %v409
    %v412 = vsub.f32 2.0, %v410
    %v413 = vsub.f32 2.0, %v411
    %v414 = vmul.f32 %v408, %v412
    %v415 = vmul.f32 %v409, %v413
    %v416 = vmul.f32 %v402, %v414
    %v417 = vmul.f32 %v403, %v415
    %vm418 = vcmp.lt.s32.totalorder %v100, 224
    %vm419 = vcmp.lt.s32.totalorder %v101, 224
    %v420 = vsub.f32 %v400, %v416
    %v421 = vsub.f32 %v401, %v417
    %v422 = vsel %vm418, %v420, 0.0
    %v423 = vsel %vm419, %v421, 0.0
    %v424 = vmul.f32 %v422, %v422
    %v425 = vmul.f32 %v423, %v423
    %v426 = vadd.f32 %v347, %v424
    %v427 = vadd.f32 %v348, %v425
    %v428 = vadd.f32 %v270, %v426
    %v429 = vadd.f32 %v271, %v427
    %430 = vrot.lane.b32.xlu0 %v90, 124
    %v431 = vpop.permute.xlu0 %430
    %432 = vrot.lane.b32.xlu0 %v91, 124
    %v433 = vpop.permute.xlu0 %432
    %vm434 = vcmask 1014784
    %v435 = vsel %vm434, %v431, %v433
    %v439 = vsel %vm434, %v433, %v431
    %440 = vrot.lane.b32.xlu0 %v94, 124
    %v441 = vpop.permute.xlu0 %440
    %442 = vrot.lane.b32.xlu0 %v95, 124
    %v443 = vpop.permute.xlu0 %442
    %v444 = vsel %vm434, %v441, %v443
    %v448 = vsel %vm434, %v443, %v441
    %449 = vrot.lane.b32.xlu0 %v92, 124
    %v450 = vpop.permute.xlu0 %449
    %451 = vrot.lane.b32.xlu0 %v93, 124
    %v452 = vpop.permute.xlu0 %451
    %v453 = vsel %vm434, %v450, %v452
    %v457 = vsel %vm434, %v452, %v450
    %458 = vrot.lane.b32.xlu0 %v96, 124
    %v459 = vpop.permute.xlu0 %458
    %460 = vrot.lane.b32.xlu0 %v97, 124
    %v461 = vpop.permute.xlu0 %460
    %v462 = vsel %vm434, %v459, %v461
    %v466 = vsel %vm434, %v461, %v459
    %v467 = vsub.f32 %v435, %v90
    %v468 = vsub.f32 %v439, %v91
    %v469 = vadd.f32 %v444, %v94
    %v470 = vadd.f32 %v448, %v95
    %v471 = vadd.f32 %v469, 1e-06
    %v472 = vadd.f32 %v470, 1e-06
    %v473 = vrcp.pop %v471
    %v474 = vrcp.pop %v472
    %v475 = vmul.f32 %v471, %v473
    %v476 = vmul.f32 %v472, %v474
    %v477 = vsub.f32 2.0, %v475
    %v478 = vsub.f32 2.0, %v476
    %v479 = vmul.f32 %v473, %v477
    %v480 = vmul.f32 %v474, %v478
    %v481 = vmul.f32 %v467, %v479
    %v482 = vmul.f32 %v468, %v480
    %v483 = vsub.f32 %v453, %v92
    %v484 = vsub.f32 %v457, %v93
    %v485 = vadd.f32 %v462, %v96
    %v486 = vadd.f32 %v466, %v97
    %v487 = vadd.f32 %v485, 1e-06
    %v488 = vadd.f32 %v486, 1e-06
    %v489 = vrcp.pop %v487
    %v490 = vrcp.pop %v488
    %v491 = vmul.f32 %v487, %v489
    %v492 = vmul.f32 %v488, %v490
    %v493 = vsub.f32 2.0, %v491
    %v494 = vsub.f32 2.0, %v492
    %v495 = vmul.f32 %v489, %v493
    %v496 = vmul.f32 %v490, %v494
    %v497 = vmul.f32 %v483, %v495
    %v498 = vmul.f32 %v484, %v496
    %vm499 = vcmp.lt.s32.totalorder %v98, 12
    %vm500 = vcmp.lt.s32.totalorder %v99, 12
    %v501 = vsub.f32 %v481, %v497
    %v502 = vsub.f32 %v482, %v498
    %v503 = vsel %vm499, %v501, 0.0
    %v504 = vsel %vm500, %v502, 0.0
    %v505 = vmul.f32 %v503, %v503
    %v506 = vmul.f32 %v504, %v504
    %507 = vrot.lane.b32.xlu0 %v90, 64
    %v508 = vpop.permute.xlu0 %507
    %509 = vrot.lane.b32.xlu0 %v91, 64
    %v510 = vpop.permute.xlu0 %509
    %vm511 = vcmask 523264
    %v512 = vsel %vm511, %v508, %v510
    %v516 = vsel %vm511, %v510, %v508
    %517 = vrot.lane.b32.xlu0 %v94, 64
    %v518 = vpop.permute.xlu0 %517
    %519 = vrot.lane.b32.xlu0 %v95, 64
    %v520 = vpop.permute.xlu0 %519
    %v521 = vsel %vm511, %v518, %v520
    %v525 = vsel %vm511, %v520, %v518
    %526 = vrot.lane.b32.xlu0 %v92, 64
    %v527 = vpop.permute.xlu0 %526
    %528 = vrot.lane.b32.xlu0 %v93, 64
    %v529 = vpop.permute.xlu0 %528
    %v530 = vsel %vm511, %v527, %v529
    %v534 = vsel %vm511, %v529, %v527
    %535 = vrot.lane.b32.xlu0 %v96, 64
    %v536 = vpop.permute.xlu0 %535
    %537 = vrot.lane.b32.xlu0 %v97, 64
    %v538 = vpop.permute.xlu0 %537
    %v539 = vsel %vm511, %v536, %v538
    %v543 = vsel %vm511, %v538, %v536
    %v544 = vsub.f32 %v512, %v90
    %v545 = vsub.f32 %v516, %v91
    %v546 = vadd.f32 %v521, %v94
    %v547 = vadd.f32 %v525, %v95
    %v548 = vadd.f32 %v546, 1e-06
    %v549 = vadd.f32 %v547, 1e-06
    %v550 = vrcp.pop %v548
    %v551 = vrcp.pop %v549
    %v552 = vmul.f32 %v548, %v550
    %v553 = vmul.f32 %v549, %v551
    %v554 = vsub.f32 2.0, %v552
    %v555 = vsub.f32 2.0, %v553
    %v556 = vmul.f32 %v550, %v554
    %v557 = vmul.f32 %v551, %v555
    %v558 = vmul.f32 %v544, %v556
    %v559 = vmul.f32 %v545, %v557
    %v560 = vsub.f32 %v530, %v92
    %v561 = vsub.f32 %v534, %v93
    %v562 = vadd.f32 %v539, %v96
    %v563 = vadd.f32 %v543, %v97
    %v564 = vadd.f32 %v562, 1e-06
    %v565 = vadd.f32 %v563, 1e-06
    %v566 = vrcp.pop %v564
    %v567 = vrcp.pop %v565
    %v568 = vmul.f32 %v564, %v566
    %v569 = vmul.f32 %v565, %v567
    %v570 = vsub.f32 2.0, %v568
    %v571 = vsub.f32 2.0, %v569
    %v572 = vmul.f32 %v566, %v570
    %v573 = vmul.f32 %v567, %v571
    %v574 = vmul.f32 %v560, %v572
    %v575 = vmul.f32 %v561, %v573
    %vm576 = vcmp.lt.s32.totalorder %v100, 192
    %vm577 = vcmp.lt.s32.totalorder %v101, 192
    %v578 = vsub.f32 %v558, %v574
    %v579 = vsub.f32 %v559, %v575
    %v580 = vsel %vm576, %v578, 0.0
    %v581 = vsel %vm577, %v579, 0.0
    %v582 = vmul.f32 %v580, %v580
    %v583 = vmul.f32 %v581, %v581
    %v584 = vadd.f32 %v505, %v582
    %v585 = vadd.f32 %v506, %v583
    %v586 = vadd.f32 %v428, %v584
    %v587 = vadd.f32 %v429, %v585
    %v588 = vld [vmem:[#allocation9] sm:$0xff]
    %v589 = vadd.f32 %v104, %v105
    %590 = vadd.xlane.f32.xlu0 %v589
    %v591 = vpop.xlane.xlu0 %590
    %v592 = vrot.slane %v591, 4
    %v593 = vadd.f32 %v591, %v592
    %v594 = vrot.slane %v593, 2
    %v595 = vadd.f32 %v593, %v594
    %v596 = vrot.slane %v595, 1
    %v597 = vadd.f32 %v595, %v596
    %s598 = vtos %v597
    %v599 = vstv %s598
    %v600 = vadd.f32 %v588, %v599
    %601 = vst [vmem:[#allocation9] sm:$0xff] %v600
    %v602 = vld [vmem:[#allocation10] sm:$0xff]
    %v603 = vadd.f32 %v586, %v587
    %604 = vadd.xlane.f32.xlu0 %v603
    %v605 = vpop.xlane.xlu0 %604
    %v606 = vrot.slane %v605, 4
    %v607 = vadd.f32 %v605, %v606
    %v608 = vrot.slane %v607, 2
    %v609 = vadd.f32 %v607, %v608
    %v610 = vrot.slane %v609, 1
    %v611 = vadd.f32 %v609, %v610
    %s612 = vtos %v611
    %v613 = vstv %s612
    %v614 = vadd.f32 %v602, %v613
    %615 = vst [vmem:[#allocation10] sm:$0xff] %v614
    // Predicated region
    $region22: #{tpu_custom_call.1} parent=1 // pred_check
      _
    $region23: #{tpu_custom_call.1} parent=1 // pred_check_branch
      %617 = sbr.rel (0) target = $region25
    $region24: #{tpu_custom_call.1} parent=1 // pred_region
      %s619 = ssub.s32 128, 128
      %620 = vsyncadd [#allocation6], %s619
      %s622 = sshll.u32 [#allocation9], 4
      %s623 = int_to_ptr.vmem [resolvable:$true] %s622
      %625 = dma.vmem_to_hbm [thread:$0]  %s623, 128, %s2, [#allocation6]
    $region25: #{tpu_custom_call.1} parent=1 // pred_fallthru
      _
    // Predicated region
    $region26: #{tpu_custom_call.1} parent=1 // pred_check
      _
    $region27: #{tpu_custom_call.1} parent=1 // pred_check_branch
      %627 = sbr.rel (0) target = $region29
    $region28: #{tpu_custom_call.1} parent=1 // pred_region
      %s629 = ssub.s32 128, 128
      %630 = vsyncadd [#allocation11], %s629
      %s632 = sshll.u32 [#allocation10], 4
      %s633 = int_to_ptr.vmem [resolvable:$true] %s632
      %635 = dma.vmem_to_hbm [thread:$0]  %s633, 128, %s3, [#allocation11]
    $region29: #{tpu_custom_call.1} parent=1 // pred_fallthru
      _
    // Predicated region
    $region30: #{tpu_custom_call.1} parent=1 // pred_check
      _
    $region31: #{tpu_custom_call.1} parent=1 // pred_check_branch
      %637 = sbr.rel (0) target = $region33
    $region32: #{tpu_custom_call.1} parent=1 // pred_region
      %638 = dma.done [#allocation6], 128
    $region33: #{tpu_custom_call.1} parent=1 // pred_fallthru
      _
    // Predicated region
    $region34: #{tpu_custom_call.1} parent=1 // pred_check
      _
    $region35: #{tpu_custom_call.1} parent=1 // pred_check_branch
      %640 = sbr.rel (0) target = $region37
    $region36: #{tpu_custom_call.1} parent=1 // pred_region
      %641 = dma.done [#allocation11], 128
    $region37: #{tpu_custom_call.1} parent=1 // pred_fallthru
      _
    %642 = vsyncpa [#allocation5], 1
    %643 = vsyncpa [#allocation8], 1
    %644 = vsyncpa [#allocation6], 1
    %645 = vsyncpa [#allocation11], 1

</llo_original>
